<compile_context>
chip_gen: v7x
topology: tpu7x:2x2x1
jax: 0.10.0
libtpu: 0.0.40
codegen_flags: <defaults>
</compile_context>

<pallas_src>
import functools

import jax
import jax.numpy as jnp
from jax.experimental import pallas as pl
from jax.experimental.pallas import tpu as pltpu

LANE = 128


def _round_up(x, m):
    return (x + m - 1) // m * m


# ---------------------------------------------------------------------------
# Buffered(1) support probe (grid-invariant operands -> single VMEM buffer).
# ---------------------------------------------------------------------------
def _probe_kernel(w_ref, o_ref):
    o_ref[...] = w_ref[...]


@functools.lru_cache(maxsize=1)
def _weight_pipeline_mode():
    """pl.Buffered(1) if single-buffering of grid-invariant inputs works here,
    else None (default pipelining)."""
    if not hasattr(pl, "Buffered"):
        return None
    try:
        spec = pl.BlockSpec((8, LANE), lambda i: (0, 0),
                            pipeline_mode=pl.Buffered(1))
        f = pl.pallas_call(
            _probe_kernel,
            out_shape=jax.ShapeDtypeStruct((8, LANE), jnp.float32),
            grid=(2,),
            in_specs=[spec],
            out_specs=pl.BlockSpec((8, LANE), lambda i: (0, 0)),
        )
        jax.block_until_ready(f(jnp.zeros((8, LANE), jnp.float32)))
        return pl.Buffered(1)
    except Exception:
        return None


def _resident_spec(shape, index_map, mode):
    if mode is None:
        return pl.BlockSpec(shape, index_map)
    return pl.BlockSpec(shape, index_map, pipeline_mode=mode)


# ---------------------------------------------------------------------------
# Kernel
# ---------------------------------------------------------------------------
def _make_mlp_kernel(n_hidden):
    """Fused MLP: n_hidden x (Linear+ReLU) then the selected task head.

    Args: task SMEM ref (scalar prefetch, only used by index_maps), x_ref (f32),
    (w1, b1), ..., (wn, bn), w_out_ref, b_out_ref, o_ref.
    Weights bf16 [in, out]; biases f32 [1, out]; accumulation f32.
    """

    def kernel(task_ref, x_ref, *rest):
        del task_ref  # head selection happens in the index_maps
        o_ref = rest[-1]
        params = rest[:-1]

        h = x_ref[...].astype(jnp.bfloat16)                 # cast after load
        for i in range(n_hidden):
            w = params[2 * i][...]                          # bf16 [Din, Dout_p]
            b = params[2 * i + 1][...]                      # f32  [1, Dout_p]
            h = jnp.dot(h, w, preferred_element_type=jnp.float32) + b
            h = jnp.maximum(h, 0.0).astype(jnp.bfloat16)    # ReLU, back to bf16

        w_o = params[-2][...]                               # bf16 [Dlast_p, Dout_p]
        b_o = params[-1][...]                               # f32  [1, Dout_p]
        o_ref[...] = jnp.dot(h, w_o, preferred_element_type=jnp.float32) + b_o

    return kernel


# ---------------------------------------------------------------------------
# Parameter preparation
# ---------------------------------------------------------------------------
def prepare_padded_params(hidden_params, output_params, input_size):
    """Zero-pad every *output* feature dim to a multiple of 128 (lane-dense).
    Contraction dims match the previous layer's padded width (the first layer
    keeps the raw input_size so x needs no feature padding).  Weights -> bf16,
    biases -> f32.  All task heads stacked for scalar-prefetch selection."""
    padded_hidden = []
    prev_actual, prev_padded = input_size, input_size
    for w, b in hidden_params:
        din, dout = w.shape
        assert din == prev_actual
        dout_p = _round_up(dout, LANE)
        w_p = jnp.zeros((prev_padded, dout_p), jnp.bfloat16).at[:din, :dout].set(
            w.astype(jnp.bfloat16))
        b_p = jnp.zeros((1, dout_p), jnp.float32).at[0, :dout].set(
            b.astype(jnp.float32))
        padded_hidden.append((w_p, b_p))
        prev_actual, prev_padded = dout, dout_p

    out_actual = output_params[0][0].shape[1]
    dout_p = _round_up(out_actual, LANE)
    w_stack, b_stack = [], []
    for w, b in output_params:
        din, dout = w.shape
        assert din == prev_actual and dout == out_actual
        w_p = jnp.zeros((prev_padded, dout_p), jnp.bfloat16).at[:din, :dout].set(
            w.astype(jnp.bfloat16))
        b_p = jnp.zeros((1, dout_p), jnp.float32).at[0, :dout].set(
            b.astype(jnp.float32))
        w_stack.append(w_p)
        b_stack.append(b_p)

    w_out_stack = jnp.stack(w_stack, axis=0)   # [n_tasks, Dlast_p, Dout_p] bf16
    b_out_stack = jnp.stack(b_stack, axis=0)   # [n_tasks, 1, Dout_p]       f32
    return padded_hidden, w_out_stack, b_out_stack


# ---------------------------------------------------------------------------
# Tiling / VMEM budgeting
# ---------------------------------------------------------------------------
def _choose_tm(batch):
    if batch <= 128:
        return batch                 # single full tile: zero padding waste
    best_tm, best_pad = None, None
    for tm in (128, 256, 512):       # ties -> smaller tm => more tiles (v7x megacore)
        pad = _round_up(batch, tm) - batch
        if best_pad is None or pad < best_pad:
            best_tm, best_pad = tm, pad
    return best_tm


def _vmem_limit_bytes(tm, in_dim, padded_hidden, last_pad, out_pad, n_weight_bufs):
    resident = 0
    for w_p, b_p in padded_hidden:
        resident += int(w_p.size) * 2 + int(b_p.size) * 4
    resident += last_pad * out_pad * 2 + out_pad * 4
    resident *= n_weight_bufs
    streamed = 2 * tm * in_dim * 4 + 2 * tm * out_pad * 4   # x in, out (double-buffered)
    inter = sum(tm * int(w_p.shape[1]) * 6 for w_p, _ in padded_hidden)  # f32 + bf16 copies
    inter += tm * out_pad * 4
    total = resident + streamed + inter + (8 << 20)          # headroom
    return int(min(max(total, 32 << 20), 128 << 20))


# ---------------------------------------------------------------------------
# Forward pass
# ---------------------------------------------------------------------------
def vanilla_nn_forward(x, padded_hidden, w_out_stack, b_out_stack, task_idx, *,
                       output_size):
    """Fused Pallas forward pass.

    x:             [batch, input_size] float32 (unpadded, no wrapper copies)
    padded_hidden: list of (W bf16 [Din_p, Dout_p], b f32 [1, Dout_p])
    w_out_stack:   [n_tasks, Dlast_p, Dout_p] bf16
    b_out_stack:   [n_tasks, 1, Dout_p] f32
    task_idx:      int32 scalar (dynamic, scalar-prefetched)
    Returns [batch, output_size] float32.
    """
    batch, in_dim = x.shape
    n_hidden = len(padded_hidden)
    last_pad = w_out_stack.shape[-2]
    out_pad = w_out_stack.shape[-1]
    if n_hidden:
        assert padded_hidden[0][0].shape[0] == in_dim
    else:
        assert last_pad == in_dim

    tm = _choose_tm(batch)
    n_tiles = pl.cdiv(batch, tm)

    mode = _weight_pipeline_mode()                 # pl.Buffered(1) or None
    n_weight_bufs = 1 if mode is not None else 2

    task_arr = jnp.asarray(task_idx, jnp.int32).reshape((1,))

    args = [x]
    in_specs = [pl.BlockSpec((tm, in_dim), lambda i, t: (i, 0))]
    for w_p, b_p in padded_hidden:
        args += [w_p, b_p]
        in_specs += [
            _resident_spec(w_p.shape, lambda i, t: (0, 0), mode),   # VMEM-resident
            _resident_spec(b_p.shape, lambda i, t: (0, 0), mode),
        ]
    args += [w_out_stack, b_out_stack]
    in_specs += [
        # Leading (task) dim squeezed; block index comes from the SMEM-prefetched task idx.
        _resident_spec((None, last_pad, out_pad), lambda i, t: (t[0], 0, 0), mode),
        _resident_spec((None, 1, out_pad), lambda i, t: (t[0], 0, 0), mode),
    ]

    vmem_bytes = _vmem_limit_bytes(tm, in_dim, padded_hidden, last_pad, out_pad,
                                   n_weight_bufs)

    out = pl.pallas_call(
        _make_mlp_kernel(n_hidden),
        out_shape=jax.ShapeDtypeStruct((batch, out_pad), jnp.float32),
        grid_spec=pltpu.PrefetchScalarGridSpec(
            num_scalar_prefetch=1,
            grid=(n_tiles,),
            in_specs=in_specs,
            out_specs=pl.BlockSpec((tm, out_pad), lambda i, t: (i, 0)),
        ),
        compiler_params=pltpu.CompilerParams(
            dimension_semantics=("parallel",),     # batch tiles independent
            vmem_limit_bytes=vmem_bytes,
        ),
    )(task_arr, *args)

    return out[:, :output_size]


# ---------------------------------------------------------------------------
# Init (matches the PyTorch module: randn(...) * 0.1), reference, test
# ---------------------------------------------------------------------------
def init_vanilla_nn_params(key, input_size, hidden_size, output_size, n_tasks=1):
    """Weights stored [in, out] (transpose of nn.Linear.weight)."""
    hidden_params = []
    prev = input_size
    for h in hidden_size:
        key, kw, kb = jax.random.split(key, 3)
        w = jax.random.normal(kw, (prev, h), dtype=jnp.float32) * 0.1
        b = jax.random.normal(kb, (h,), dtype=jnp.float32) * 0.1
        hidden_params.append((w, b))
        prev = h

    output_params = []
    for _ in range(n_tasks):
        key, kw, kb = jax.random.split(key, 3)
        w_o = jax.random.normal(kw, (prev, output_size), dtype=jnp.float32) * 0.1
        b_o = jax.random.normal(kb, (output_size,), dtype=jnp.float32) * 0.1
        output_params.append((w_o, b_o))

    return hidden_params, output_params


def _reference_forward(x, hidden_params, output_params, task_idx):
    h = x
    for w, b in hidden_params:
        h = jnp.maximum(h @ w + b, 0.0)
    w_o, b_o = output_params[task_idx]
    return h @ w_o + b_o


if __name__ == "__main__":
    batch = 8
    input_size = 32
    hidden_size = [64, 32]
    output_size = 16
    n_tasks = 2

    key = jax.random.PRNGKey(0)
    key, kx = jax.random.split(key)
    x = jax.random.normal(kx, (batch, input_size), dtype=jnp.float32)

    hidden_params, output_params = init_vanilla_nn_params(
        key, input_size, hidden_size, output_size, n_tasks=n_tasks)
    padded_hidden, w_out_stack, b_out_stack = prepare_padded_params(
        hidden_params, output_params, input_size)

    fwd = jax.jit(functools.partial(vanilla_nn_forward, output_size=output_size))

    for task_idx in range(n_tasks):
        out = fwd(x, padded_hidden, w_out_stack, b_out_stack, jnp.int32(task_idx))
        out = jax.block_until_ready(out)
        ref = _reference_forward(x, hidden_params, output_params, task_idx)
        assert out.shape == (batch, output_size)
        # bf16 MXU operands (f32 accumulation) -> relaxed tolerance.
        assert jnp.allclose(out, ref, atol=2e-2, rtol=2e-2), (
            f"task {task_idx}: max abs err {float(jnp.max(jnp.abs(out - ref)))}")

    print("KERNEL_OK")
</pallas_src>

<mosaic_0001>
module attributes {stable_mosaic.version = 11 : i64} {
  func.func @kernel(%arg0: i32, %arg1: memref<1xi32, #tpu.memory_space<smem>>, %arg2: memref<8x32xf32, #tpu.memory_space<vmem>>, %arg3: memref<32x128xbf16, #tpu.memory_space<vmem>>, %arg4: memref<1x128xf32, #tpu.memory_space<vmem>>, %arg5: memref<128x128xbf16, #tpu.memory_space<vmem>>, %arg6: memref<1x128xf32, #tpu.memory_space<vmem>>, %arg7: memref<1x128x128xbf16, #tpu.memory_space<vmem>>, %arg8: memref<1x1x128xf32, #tpu.memory_space<vmem>>, %arg9: memref<8x128xf32, #tpu.memory_space<vmem>>) attributes {dimension_semantics = [#tpu.dimension_semantics<parallel>], iteration_bounds = array<i64: 1>, scalar_prefetch = 1 : i64, scratch_operands = 0 : i64, tpu.core_type = #tpu.core_type<tc>, window_params = [{transform_indices = @transform_0, window_bounds = array<i64: 8, 32>}, {pipeline_mode = #tpu.pipeline_mode<synchronous>, transform_indices = @transform_1, window_bounds = array<i64: 32, 128>}, {pipeline_mode = #tpu.pipeline_mode<synchronous>, transform_indices = @transform_2, window_bounds = array<i64: 1, 128>}, {pipeline_mode = #tpu.pipeline_mode<synchronous>, transform_indices = @transform_3, window_bounds = array<i64: 128, 128>}, {pipeline_mode = #tpu.pipeline_mode<synchronous>, transform_indices = @transform_4, window_bounds = array<i64: 1, 128>}, {pipeline_mode = #tpu.pipeline_mode<synchronous>, transform_indices = @transform_5, window_bounds = array<i64: 1, 128, 128>}, {pipeline_mode = #tpu.pipeline_mode<synchronous>, transform_indices = @transform_6, window_bounds = array<i64: 1, 1, 128>}, {transform_indices = @transform_7, window_bounds = array<i64: 8, 128>}]} {
    %c0 = arith.constant 0 : index
    %c0_0 = arith.constant 0 : index
    %0 = vector.load %arg2[%c0, %c0_0] : memref<8x32xf32, #tpu.memory_space<vmem>>, vector<8x32xf32>
    %1 = arith.truncf %0 : vector<8x32xf32> to vector<8x32xbf16>
    %c0_1 = arith.constant 0 : index
    %c0_2 = arith.constant 0 : index
    %2 = vector.load %arg3[%c0_1, %c0_2] : memref<32x128xbf16, #tpu.memory_space<vmem>>, vector<32x128xbf16>
    %c0_3 = arith.constant 0 : index
    %c0_4 = arith.constant 0 : index
    %3 = vector.load %arg4[%c0_3, %c0_4] : memref<1x128xf32, #tpu.memory_space<vmem>>, vector<1x128xf32>
    %cst = arith.constant dense<0.000000e+00> : vector<8x128xf32>
    %4 = tpu.matmul %1, %2, %cst {dimension_numbers = #tpu.dot_dimension_numbers<[1], [0], [0], [1], [0, 0, 1, 1], [], []>} : vector<8x32xbf16>, vector<32x128xbf16>, vector<8x128xf32> -> vector<8x128xf32>
    %5 = vector.broadcast %3 : vector<1x128xf32> to vector<8x128xf32>
    %6 = arith.addf %4, %5 : vector<8x128xf32>
    %cst_5 = arith.constant 0.000000e+00 : f32
    %7 = vector.broadcast %cst_5 : f32 to vector<8x128xf32>
    %8 = arith.maximumf %6, %7 : vector<8x128xf32>
    %9 = arith.truncf %8 : vector<8x128xf32> to vector<8x128xbf16>
    %c0_6 = arith.constant 0 : index
    %c0_7 = arith.constant 0 : index
    %10 = vector.load %arg5[%c0_6, %c0_7] : memref<128x128xbf16, #tpu.memory_space<vmem>>, vector<128x128xbf16>
    %c0_8 = arith.constant 0 : index
    %c0_9 = arith.constant 0 : index
    %11 = vector.load %arg6[%c0_8, %c0_9] : memref<1x128xf32, #tpu.memory_space<vmem>>, vector<1x128xf32>
    %cst_10 = arith.constant dense<0.000000e+00> : vector<8x128xf32>
    %12 = tpu.matmul %9, %10, %cst_10 {dimension_numbers = #tpu.dot_dimension_numbers<[1], [0], [0], [1], [0, 0, 1, 1], [], []>} : vector<8x128xbf16>, vector<128x128xbf16>, vector<8x128xf32> -> vector<8x128xf32>
    %13 = vector.broadcast %11 : vector<1x128xf32> to vector<8x128xf32>
    %14 = arith.addf %12, %13 : vector<8x128xf32>
    %cst_11 = arith.constant 0.000000e+00 : f32
    %15 = vector.broadcast %cst_11 : f32 to vector<8x128xf32>
    %16 = arith.maximumf %14, %15 : vector<8x128xf32>
    %17 = arith.truncf %16 : vector<8x128xf32> to vector<8x128xbf16>
    %c0_12 = arith.constant 0 : index
    %c0_13 = arith.constant 0 : index
    %c0_14 = arith.constant 0 : index
    %18 = vector.load %arg7[%c0_12, %c0_13, %c0_14] : memref<1x128x128xbf16, #tpu.memory_space<vmem>>, vector<1x128x128xbf16>
    %19 = vector.shape_cast %18 : vector<1x128x128xbf16> to vector<128x128xbf16>
    %c0_15 = arith.constant 0 : index
    %c0_16 = arith.constant 0 : index
    %c0_17 = arith.constant 0 : index
    %20 = vector.load %arg8[%c0_15, %c0_16, %c0_17] : memref<1x1x128xf32, #tpu.memory_space<vmem>>, vector<1x1x128xf32>
    %21 = vector.shape_cast %20 : vector<1x1x128xf32> to vector<1x128xf32>
    %cst_18 = arith.constant dense<0.000000e+00> : vector<8x128xf32>
    %22 = tpu.matmul %17, %19, %cst_18 {dimension_numbers = #tpu.dot_dimension_numbers<[1], [0], [0], [1], [0, 0, 1, 1], [], []>} : vector<8x128xbf16>, vector<128x128xbf16>, vector<8x128xf32> -> vector<8x128xf32>
    %23 = vector.broadcast %21 : vector<1x128xf32> to vector<8x128xf32>
    %24 = arith.addf %22, %23 : vector<8x128xf32>
    %c0_19 = arith.constant 0 : index
    %c0_20 = arith.constant 0 : index
    %25 = vector.load %arg9[%c0_19, %c0_20] : memref<8x128xf32, #tpu.memory_space<vmem>>, vector<8x128xf32>
    tpu.vector_store %arg9[%c0_19, %c0_20], %24 {strides = array<i32>} : memref<8x128xf32, #tpu.memory_space<vmem>>, vector<8x128xf32>,
    return
  }
  func.func @transform_0(%arg0: i32, %arg1: memref<1xi32, #tpu.memory_space<smem>>) -> (i32, i32) {
    %c0_i32 = arith.constant 0 : i32
    %c0_i32_0 = arith.constant 0 : i32
    return %arg0, %c0_i32 : i32, i32
  }
  func.func @transform_1(%arg0: i32, %arg1: memref<1xi32, #tpu.memory_space<smem>>) -> (i32, i32) {
    %c0_i32 = arith.constant 0 : i32
    %c0_i32_0 = arith.constant 0 : i32
    %c0_i32_1 = arith.constant 0 : i32
    return %c0_i32, %c0_i32_0 : i32, i32
  }
  func.func @transform_2(%arg0: i32, %arg1: memref<1xi32, #tpu.memory_space<smem>>) -> (i32, i32) {
    %c0_i32 = arith.constant 0 : i32
    %c0_i32_0 = arith.constant 0 : i32
    %c0_i32_1 = arith.constant 0 : i32
    return %c0_i32, %c0_i32_0 : i32, i32
  }
  func.func @transform_3(%arg0: i32, %arg1: memref<1xi32, #tpu.memory_space<smem>>) -> (i32, i32) {
    %c0_i32 = arith.constant 0 : i32
    %c0_i32_0 = arith.constant 0 : i32
    %c0_i32_1 = arith.constant 0 : i32
    return %c0_i32, %c0_i32_0 : i32, i32
  }
  func.func @transform_4(%arg0: i32, %arg1: memref<1xi32, #tpu.memory_space<smem>>) -> (i32, i32) {
    %c0_i32 = arith.constant 0 : i32
    %c0_i32_0 = arith.constant 0 : i32
    %c0_i32_1 = arith.constant 0 : i32
    return %c0_i32, %c0_i32_0 : i32, i32
  }
  func.func @transform_5(%arg0: i32, %arg1: memref<1xi32, #tpu.memory_space<smem>>) -> (i32, i32, i32) {
    %c0 = arith.constant 0 : index
    %0 = memref.load %arg1[%c0] : memref<1xi32, #tpu.memory_space<smem>>
    %c0_i32 = arith.constant 0 : i32
    %c0_i32_0 = arith.constant 0 : i32
    %c0_i32_1 = arith.constant 0 : i32
    return %0, %c0_i32, %c0_i32_0 : i32, i32, i32
  }
  func.func @transform_6(%arg0: i32, %arg1: memref<1xi32, #tpu.memory_space<smem>>) -> (i32, i32, i32) {
    %c0 = arith.constant 0 : index
    %0 = memref.load %arg1[%c0] : memref<1xi32, #tpu.memory_space<smem>>
    %c0_i32 = arith.constant 0 : i32
    %c0_i32_0 = arith.constant 0 : i32
    %c0_i32_1 = arith.constant 0 : i32
    return %0, %c0_i32, %c0_i32_0 : i32, i32, i32
  }
  func.func @transform_7(%arg0: i32, %arg1: memref<1xi32, #tpu.memory_space<smem>>) -> (i32, i32) {
    %c0_i32 = arith.constant 0 : i32
    %c0_i32_0 = arith.constant 0 : i32
    return %arg0, %c0_i32 : i32, i32
  }
}

</mosaic_0001>

<llo_original>
// kernel: vanilla_nn_forward.1
$region0: #{vanilla_nn_forward.1}
  #allocation0 [shape = 'u32[]', space=smem, size = 0x4, offset = 0x4, fixed_abs, tag = 'smem constant byte address 0x4 - core index']
  #allocation1 [shape = 'u32[144,128]{1,0:T(1,128)}', space=vmem, size = 0x12000, scoped, tag = 'internal scratch']
  #allocation2 [shape = 's32[1]{0}', space=sflag, size = 0x4, scoped, tag = 'scoped memory for vanilla_nn_forward.1']
  #allocation3 [shape = 's32[1]{0:T(128)S(6)}', space=smem, size = 0x200, scoped, tag = 'prefetched SMEM operand 0']
  %s0 = inlined_call_operand.<no memory space> [shape: s32[1], index: 0, kind: input, shape index: {}]
  %s1 = inlined_call_operand.hbm [shape: f32[8,32], index: 1, kind: input, shape index: {}]
  %s2 = inlined_call_operand.hbm [shape: bf16[32,128], index: 2, kind: input, shape index: {}]
  %s3 = inlined_call_operand.vmem [shape: f32[1,128], index: 3, kind: input, shape index: {}]
  %s4 = inlined_call_operand.hbm [shape: bf16[128,128], index: 4, kind: input, shape index: {}]
  %s5 = inlined_call_operand.vmem [shape: f32[1,128], index: 5, kind: input, shape index: {}]
  %s6 = inlined_call_operand.hbm [shape: bf16[2,128,128], index: 6, kind: input, shape index: {}]
  %s7 = inlined_call_operand.vmem [shape: f32[2,1,128], index: 7, kind: input, shape index: {}]
  %s8 = inlined_call_operand.hbm [shape: f32[8,128], index: 8, kind: output, shape index: {}]
  %s9 = sld [smem:[#allocation0]]
  $region54: #{vanilla_nn_forward.1} parent=0
    _
  %s11 = ssub.s32 1, %s9
  %s12 = scalar_select 0, %s11, %s9
  %13 = sst [smem:[#allocation3]] %s0
  $region1: #{vanilla_nn_forward.1} parent=0
    #allocation4 [shape = 'u8[4096]{0}', space=vmem, size = 0x1000, scoped, tag = 'input window, operand 1, single buffered']
    #allocation5 [shape = 's32[1]{0}', space=sflag, size = 0x4, scoped, tag = 'scoped memory for vanilla_nn_forward.1']
    #allocation6 [shape = 's32[1]{0}', space=sflag, size = 0x4, scoped, tag = 'scoped memory for vanilla_nn_forward.1']
    #allocation7 [shape = 'u8[8192]{0}', space=vmem, size = 0x2000, scoped, tag = 'input window, operand 2, single buffered']
    #allocation8 [shape = 's32[1]{0}', space=sflag, size = 0x4, scoped, tag = 'scoped memory for vanilla_nn_forward.1']
    #allocation9 [shape = 'u8[32768]{0}', space=vmem, size = 0x8000, scoped, tag = 'input window, operand 4, single buffered']
    #allocation10 [shape = 'u8[32768]{0}', space=vmem, size = 0x8000, scoped, tag = 'input window, operand 6, single buffered']
    #allocation11 [shape = 's32[1]{0}', space=sflag, size = 0x4, scoped, tag = 'scoped memory for vanilla_nn_forward.1']
    #allocation12 [shape = 'u8[4096]{0}', space=vmem, size = 0x1000, scoped, tag = 'output window, operand 0, single buffered']
    %14 = vsyncpa [#allocation5], 0
    %15 = vsyncpa [#allocation8], 0
    %16 = vsyncpa [#allocation11], 0
    %17 = vsyncpa [#allocation6], 0
    // Predicated region
    $region2: #{vanilla_nn_forward.1} parent=1 // pred_check
      _
    $region3: #{vanilla_nn_forward.1} parent=1 // pred_check_branch
      %19 = sbr.rel (0) target = $region5
    $region4: #{vanilla_nn_forward.1} parent=1 // pred_region
      %s21 = ssub.s32 128, 128
      %22 = vsyncadd [#allocation5], %s21
      %s24 = sshll.u32 [#allocation4], 4
      %s25 = int_to_ptr.vmem [resolvable:$true] %s24
      %27 = dma.hbm_to_vmem [thread:$0]  %s1, 128, %s25, [#allocation5]
    $region5: #{vanilla_nn_forward.1} parent=1 // pred_fallthru
      _
    // Predicated region
    $region6: #{vanilla_nn_forward.1} parent=1 // pred_check
      _
    $region7: #{vanilla_nn_forward.1} parent=1 // pred_check_branch
      %29 = sbr.rel (0) target = $region9
    $region8: #{vanilla_nn_forward.1} parent=1 // pred_region
      %s31 = ssub.s32 256, 256
      %32 = vsyncadd [#allocation8], %s31
      %s33 = sshll.u32 [#allocation7], 4
      %s34 = int_to_ptr.vmem [resolvable:$true] %s33
      %39 = dma.hbm_to_vmem [thread:$0]  %s2, 256, %s34, [#allocation8], 64, 64, 4
    $region9: #{vanilla_nn_forward.1} parent=1 // pred_fallthru
      _
    // Predicated region
    $region10: #{vanilla_nn_forward.1} parent=1 // pred_check
      _
    $region11: #{vanilla_nn_forward.1} parent=1 // pred_check_branch
      %41 = sbr.rel (0) target = $region13
    $region12: #{vanilla_nn_forward.1} parent=1 // pred_region
      _
    $region13: #{vanilla_nn_forward.1} parent=1 // pred_fallthru
      _
    // Predicated region
    $region14: #{vanilla_nn_forward.1} parent=1 // pred_check
      _
    $region15: #{vanilla_nn_forward.1} parent=1 // pred_check_branch
      %43 = sbr.rel (0) target = $region17
    $region16: #{vanilla_nn_forward.1} parent=1 // pred_region
      %s45 = ssub.s32 1024, 1024
      %46 = vsyncadd [#allocation8], %s45
      %s47 = sshll.u32 [#allocation9], 4
      %s48 = int_to_ptr.vmem [resolvable:$true] %s47
      %53 = dma.hbm_to_vmem [thread:$0]  %s4, 1024, %s48, [#allocation8], 64, 64, 4
    $region17: #{vanilla_nn_forward.1} parent=1 // pred_fallthru
      _
    // Predicated region
    $region18: #{vanilla_nn_forward.1} parent=1 // pred_check
      _
    $region19: #{vanilla_nn_forward.1} parent=1 // pred_check_branch
      %55 = sbr.rel (0) target = $region21
    $region20: #{vanilla_nn_forward.1} parent=1 // pred_region
      _
    $region21: #{vanilla_nn_forward.1} parent=1 // pred_fallthru
      _
    // Predicated region
    $region22: #{vanilla_nn_forward.1} parent=1 // pred_check
      _
    $region23: #{vanilla_nn_forward.1} parent=1 // pred_check_branch
      %57 = sbr.rel (0) target = $region25
    $region24: #{vanilla_nn_forward.1} parent=1 // pred_region
      %s58 = sld [smem:[#allocation3]]
      %s60 = ssub.s32 1024, 1024
      %61 = vsyncadd [#allocation11], %s60
      %s62 = smul.addr %s58, 16
      %s63 = smul.addr %s62, 64
      %s64 = scalar_lea.hbm %s6, %s63
      %s65 = sshll.u32 [#allocation10], 4
      %s66 = int_to_ptr.vmem [resolvable:$true] %s65
      %71 = dma.hbm_to_vmem [thread:$0]  %s64, 1024, %s66, [#allocation11], 64, 64, 4
    $region25: #{vanilla_nn_forward.1} parent=1 // pred_fallthru
      _
    // Predicated region
    $region26: #{vanilla_nn_forward.1} parent=1 // pred_check
      _
    $region27: #{vanilla_nn_forward.1} parent=1 // pred_check_branch
      %73 = sbr.rel (0) target = $region29
    $region28: #{vanilla_nn_forward.1} parent=1 // pred_region
      %s74 = sld [smem:[#allocation3]]
      %p75 = scmp.lt.s32.totalorder %s74, 1
      %s76 = scalar_select %p75, %s74, 1
      %s77 = scalar_lea.vmem %s7, %s76
      %s78 = sld [smem:[#allocation3]]
    $region29: #{vanilla_nn_forward.1} parent=1 // pred_fallthru
      _
    // Predicated region
    $region30: #{vanilla_nn_forward.1} parent=1 // pred_check
      _
    $region31: #{vanilla_nn_forward.1} parent=1 // pred_check_branch
      %80 = sbr.rel (0) target = $region33
    $region32: #{vanilla_nn_forward.1} parent=1 // pred_region
      %81 = dma.done [#allocation5], 128
    $region33: #{vanilla_nn_forward.1} parent=1 // pred_fallthru
      _
    // Predicated region
    $region34: #{vanilla_nn_forward.1} parent=1 // pred_check
      _
    $region35: #{vanilla_nn_forward.1} parent=1 // pred_check_branch
      %83 = sbr.rel (0) target = $region37
    $region36: #{vanilla_nn_forward.1} parent=1 // pred_region
      %84 = dma.done [#allocation8], 256
    $region37: #{vanilla_nn_forward.1} parent=1 // pred_fallthru
      _
    // Predicated region
    $region38: #{vanilla_nn_forward.1} parent=1 // pred_check
      _
    $region39: #{vanilla_nn_forward.1} parent=1 // pred_check_branch
      %86 = sbr.rel (0) target = $region41
    $region40: #{vanilla_nn_forward.1} parent=1 // pred_region
      %87 = dma.done [#allocation8], 1024
    $region41: #{vanilla_nn_forward.1} parent=1 // pred_fallthru
      _
    // Predicated region
    $region42: #{vanilla_nn_forward.1} parent=1 // pred_check
      _
    $region43: #{vanilla_nn_forward.1} parent=1 // pred_check_branch
      %89 = sbr.rel (0) target = $region45
    $region44: #{vanilla_nn_forward.1} parent=1 // pred_region
      %90 = dma.done [#allocation11], 1024
    $region45: #{vanilla_nn_forward.1} parent=1 // pred_fallthru
      _
    %s91 = sld [smem:[#allocation3]]
    %p92 = scmp.lt.s32.totalorder %s91, 1
    %s93 = scalar_select %p92, %s91, 1
    %s94 = scalar_lea.vmem %s7, %s93
    %s95 = sld [smem:[#allocation3]]
    %s96 = sld [smem:[#allocation3]]
    %p97 = scmp.lt.s32.totalorder %s96, 1
    %s98 = scalar_select %p97, %s96, 1
    %s99 = scalar_lea.vmem %s7, %s98
    %s100 = sld [smem:[#allocation3]]
    %v102 = vld [vmem:[#allocation4] sm:$0xff]
    %v103 = vpack.c.bf16 %v102, %v102
    %v104 = vld [vmem:[#allocation7] sm:$0xf]
    %v105 = vld [vmem:[#allocation7 + $0x4] sm:$0xf]
    %v106 = vld [vmem:[#allocation7 + $0x8] sm:$0xf]
    %v107 = vld [vmem:[#allocation7 + $0xc] sm:$0xf]
    %v108 = vld [vmem:[%s3] sm:$0x1]
    %v110 = vlaneseq
    %v111 = vshrl.u32 %v110, 7
    %v112 = vsub.s32 0, %v111
    %v113 = vrot.slane %v108, %v112
    %v119 = vunpack.c.l.b16 %v104
    %v120 = vunpack.c.l.b16 %v105
    %v121 = vunpack.c.l.b16 %v106
    %v122 = vunpack.c.l.b16 %v107
    %v123 = vpack.c.b16 %v120, %v119
    %v124 = vpack.c.b16 %v122, %v121
    %vm127 = vcmask 261120
    %v129 = vsel %vm127, %v103, 0
    %131 = vmatprep.subr.bf16.mxu0 0
    %132 = vmatpush1.bf16.msra.mxu0 %v123
    %133 = vmatprep.subr.bf16.mxu0 0
    %134 = vmatpush1.bf16.msra.mxu0 %v124
    %135 = vmatprep.subr.bf16.mxu0 0
    %136 = vmatpush1.bf16.msra.mxu0 0
    %137 = vmatprep.subr.bf16.mxu0 0
    %138 = vmatpush1.bf16.msra.mxu0 0
    %139 = vmatprep.subr.bf16.mxu0 0
    %140 = vmatpush1.bf16.msra.mxu0 0
    %141 = vmatprep.subr.bf16.mxu0 0
    %142 = vmatpush1.bf16.msra.mxu0 0
    %143 = vmatprep.subr.bf16.mxu0 0
    %144 = vmatpush1.bf16.msra.mxu0 0
    %145 = vmatprep.subr.bf16.mxu0 0
    %146 = vmatpush1.bf16.msra.mxu0 0
    %147 = vmatprep.subr.bf16.mxu0 0
    %148 = vmatpush1.bf16.msra.mxu0 0
    %149 = vmatprep.subr.bf16.mxu0 0
    %150 = vmatpush1.bf16.msra.mxu0 0
    %151 = vmatprep.subr.bf16.mxu0 0
    %152 = vmatpush1.bf16.msra.mxu0 0
    %153 = vmatprep.subr.bf16.mxu0 0
    %154 = vmatpush1.bf16.msra.mxu0 0
    %155 = vmatprep.subr.bf16.mxu0 0
    %156 = vmatpush1.bf16.msra.mxu0 0
    %157 = vmatprep.subr.bf16.mxu0 0
    %158 = vmatpush1.bf16.msra.mxu0 0
    %159 = vmatprep.subr.bf16.mxu0 0
    %160 = vmatpush1.bf16.msra.mxu0 0
    %161 = vmatprep.subr.bf16.mxu0 0
    %162 = vmatpush1.bf16.msra.mxu0 0
    %163 = vmatprep.mubr.bf16.mxu0 0
    %164 = vmatmul.mubr.bf16.gmra.mrb[0].mxu0 %v129
    %v165 = vpop.f32.mrb[0].mxu0
    %v166 = vadd.f32 %v113, %v165
    %v167 = vpop.f32.mrb[0].mxu0
    %v168 = vpop.f32.mrb[0].mxu0
    %v169 = vpop.f32.mrb[0].mxu0
    %170 = vdwg.mxu0
    %v171 = vmax.f32 %v166, 0.0
    %v172 = vpack.c.bf16 %v171, %v171
    %v173 = vld [vmem:[#allocation9] sm:$0xf]
    %v174 = vld [vmem:[#allocation9 + $0x4] sm:$0xf]
    %v175 = vld [vmem:[#allocation9 + $0x8] sm:$0xf]
    %v176 = vld [vmem:[#allocation9 + $0xc] sm:$0xf]
    %v177 = vld [vmem:[#allocation9 + $0x10] sm:$0xf]
    %v178 = vld [vmem:[#allocation9 + $0x14] sm:$0xf]
    %v179 = vld [vmem:[#allocation9 + $0x18] sm:$0xf]
    %v180 = vld [vmem:[#allocation9 + $0x1c] sm:$0xf]
    %v181 = vld [vmem:[#allocation9 + $0x20] sm:$0xf]
    %v182 = vld [vmem:[#allocation9 + $0x24] sm:$0xf]
    %v183 = vld [vmem:[#allocation9 + $0x28] sm:$0xf]
    %v184 = vld [vmem:[#allocation9 + $0x2c] sm:$0xf]
    %v185 = vld [vmem:[#allocation9 + $0x30] sm:$0xf]
    %v186 = vld [vmem:[#allocation9 + $0x34] sm:$0xf]
    %v187 = vld [vmem:[#allocation9 + $0x38] sm:$0xf]
    %v188 = vld [vmem:[#allocation9 + $0x3c] sm:$0xf]
    %v189 = vld [vmem:[%s5] sm:$0x1]
    %v191 = vlaneseq
    %v192 = vshrl.u32 %v191, 7
    %v193 = vsub.s32 0, %v192
    %v194 = vrot.slane %v189, %v193
    %v212 = vunpack.c.l.b16 %v173
    %v213 = vunpack.c.l.b16 %v174
    %v214 = vunpack.c.l.b16 %v175
    %v215 = vunpack.c.l.b16 %v176
    %v216 = vunpack.c.l.b16 %v177
    %v217 = vunpack.c.l.b16 %v178
    %v218 = vunpack.c.l.b16 %v179
    %v219 = vunpack.c.l.b16 %v180
    %v220 = vunpack.c.l.b16 %v181
    %v221 = vunpack.c.l.b16 %v182
    %v222 = vunpack.c.l.b16 %v183
    %v223 = vunpack.c.l.b16 %v184
    %v224 = vunpack.c.l.b16 %v185
    %v225 = vunpack.c.l.b16 %v186
    %v226 = vunpack.c.l.b16 %v187
    %v227 = vunpack.c.l.b16 %v188
    %v228 = vpack.c.b16 %v213, %v212
    %v229 = vpack.c.b16 %v215, %v214
    %v230 = vpack.c.b16 %v217, %v216
    %v231 = vpack.c.b16 %v219, %v218
    %v232 = vpack.c.b16 %v221, %v220
    %v233 = vpack.c.b16 %v223, %v222
    %v234 = vpack.c.b16 %v225, %v224
    %v235 = vpack.c.b16 %v227, %v226
    %244 = vmatprep.subr.bf16.mxu0 0
    %245 = vmatpush1.bf16.msra.mxu0 %v228
    %246 = vmatprep.subr.bf16.mxu0 0
    %247 = vmatpush1.bf16.msra.mxu0 %v229
    %248 = vmatprep.subr.bf16.mxu0 0
    %249 = vmatpush1.bf16.msra.mxu0 %v230
    %250 = vmatprep.subr.bf16.mxu0 0
    %251 = vmatpush1.bf16.msra.mxu0 %v231
    %252 = vmatprep.subr.bf16.mxu0 0
    %253 = vmatpush1.bf16.msra.mxu0 %v232
    %254 = vmatprep.subr.bf16.mxu0 0
    %255 = vmatpush1.bf16.msra.mxu0 %v233
    %256 = vmatprep.subr.bf16.mxu0 0
    %257 = vmatpush1.bf16.msra.mxu0 %v234
    %258 = vmatprep.subr.bf16.mxu0 0
    %259 = vmatpush1.bf16.msra.mxu0 %v235
    %260 = vmatprep.subr.bf16.mxu0 0
    %261 = vmatpush1.bf16.msra.mxu0 0
    %262 = vmatprep.subr.bf16.mxu0 0
    %263 = vmatpush1.bf16.msra.mxu0 0
    %264 = vmatprep.subr.bf16.mxu0 0
    %265 = vmatpush1.bf16.msra.mxu0 0
    %266 = vmatprep.subr.bf16.mxu0 0
    %267 = vmatpush1.bf16.msra.mxu0 0
    %268 = vmatprep.subr.bf16.mxu0 0
    %269 = vmatpush1.bf16.msra.mxu0 0
    %270 = vmatprep.subr.bf16.mxu0 0
    %271 = vmatpush1.bf16.msra.mxu0 0
    %272 = vmatprep.subr.bf16.mxu0 0
    %273 = vmatpush1.bf16.msra.mxu0 0
    %274 = vmatprep.subr.bf16.mxu0 0
    %275 = vmatpush1.bf16.msra.mxu0 0
    %276 = vmatprep.mubr.bf16.mxu0 0
    %277 = vmatmul.mubr.bf16.gmra.mrb[0].mxu0 %v172
    %v278 = vpop.f32.mrb[0].mxu0
    %v279 = vadd.f32 %v194, %v278
    %v280 = vpop.f32.mrb[0].mxu0
    %v281 = vpop.f32.mrb[0].mxu0
    %v282 = vpop.f32.mrb[0].mxu0
    %283 = vdwg.mxu0
    %v284 = vmax.f32 %v279, 0.0
    %v285 = vpack.c.bf16 %v284, %v284
    %v286 = vld [vmem:[#allocation10] sm:$0xf]
    %v287 = vld [vmem:[#allocation10 + $0x4] sm:$0xf]
    %v288 = vld [vmem:[#allocation10 + $0x8] sm:$0xf]
    %v289 = vld [vmem:[#allocation10 + $0xc] sm:$0xf]
    %v290 = vld [vmem:[#allocation10 + $0x10] sm:$0xf]
    %v291 = vld [vmem:[#allocation10 + $0x14] sm:$0xf]
    %v292 = vld [vmem:[#allocation10 + $0x18] sm:$0xf]
    %v293 = vld [vmem:[#allocation10 + $0x1c] sm:$0xf]
    %v294 = vld [vmem:[#allocation10 + $0x20] sm:$0xf]
    %v295 = vld [vmem:[#allocation10 + $0x24] sm:$0xf]
    %v296 = vld [vmem:[#allocation10 + $0x28] sm:$0xf]
    %v297 = vld [vmem:[#allocation10 + $0x2c] sm:$0xf]
    %v298 = vld [vmem:[#allocation10 + $0x30] sm:$0xf]
    %v299 = vld [vmem:[#allocation10 + $0x34] sm:$0xf]
    %v300 = vld [vmem:[#allocation10 + $0x38] sm:$0xf]
    %v301 = vld [vmem:[#allocation10 + $0x3c] sm:$0xf]
    %v302 = vld [vmem:[%s99] sm:$0x1]
    %v304 = vlaneseq
    %v305 = vshrl.u32 %v304, 7
    %v306 = vsub.s32 0, %v305
    %v307 = vrot.slane %v302, %v306
    %v325 = vunpack.c.l.b16 %v286
    %v326 = vunpack.c.l.b16 %v287
    %v327 = vunpack.c.l.b16 %v288
    %v328 = vunpack.c.l.b16 %v289
    %v329 = vunpack.c.l.b16 %v290
    %v330 = vunpack.c.l.b16 %v291
    %v331 = vunpack.c.l.b16 %v292
    %v332 = vunpack.c.l.b16 %v293
    %v333 = vunpack.c.l.b16 %v294
    %v334 = vunpack.c.l.b16 %v295
    %v335 = vunpack.c.l.b16 %v296
    %v336 = vunpack.c.l.b16 %v297
    %v337 = vunpack.c.l.b16 %v298
    %v338 = vunpack.c.l.b16 %v299
    %v339 = vunpack.c.l.b16 %v300
    %v340 = vunpack.c.l.b16 %v301
    %v341 = vpack.c.b16 %v326, %v325
    %v342 = vpack.c.b16 %v328, %v327
    %v343 = vpack.c.b16 %v330, %v329
    %v344 = vpack.c.b16 %v332, %v331
    %v345 = vpack.c.b16 %v334, %v333
    %v346 = vpack.c.b16 %v336, %v335
    %v347 = vpack.c.b16 %v338, %v337
    %v348 = vpack.c.b16 %v340, %v339
    %357 = vmatprep.subr.bf16.mxu0 0
    %358 = vmatpush1.bf16.msra.mxu0 %v341
    %359 = vmatprep.subr.bf16.mxu0 0
    %360 = vmatpush1.bf16.msra.mxu0 %v342
    %361 = vmatprep.subr.bf16.mxu0 0
    %362 = vmatpush1.bf16.msra.mxu0 %v343
    %363 = vmatprep.subr.bf16.mxu0 0
    %364 = vmatpush1.bf16.msra.mxu0 %v344
    %365 = vmatprep.subr.bf16.mxu0 0
    %366 = vmatpush1.bf16.msra.mxu0 %v345
    %367 = vmatprep.subr.bf16.mxu0 0
    %368 = vmatpush1.bf16.msra.mxu0 %v346
    %369 = vmatprep.subr.bf16.mxu0 0
    %370 = vmatpush1.bf16.msra.mxu0 %v347
    %371 = vmatprep.subr.bf16.mxu0 0
    %372 = vmatpush1.bf16.msra.mxu0 %v348
    %373 = vmatprep.subr.bf16.mxu0 0
    %374 = vmatpush1.bf16.msra.mxu0 0
    %375 = vmatprep.subr.bf16.mxu0 0
    %376 = vmatpush1.bf16.msra.mxu0 0
    %377 = vmatprep.subr.bf16.mxu0 0
    %378 = vmatpush1.bf16.msra.mxu0 0
    %379 = vmatprep.subr.bf16.mxu0 0
    %380 = vmatpush1.bf16.msra.mxu0 0
    %381 = vmatprep.subr.bf16.mxu0 0
    %382 = vmatpush1.bf16.msra.mxu0 0
    %383 = vmatprep.subr.bf16.mxu0 0
    %384 = vmatpush1.bf16.msra.mxu0 0
    %385 = vmatprep.subr.bf16.mxu0 0
    %386 = vmatpush1.bf16.msra.mxu0 0
    %387 = vmatprep.subr.bf16.mxu0 0
    %388 = vmatpush1.bf16.msra.mxu0 0
    %389 = vmatprep.mubr.bf16.mxu0 0
    %390 = vmatmul.mubr.bf16.gmra.mrb[0].mxu0 %v285
    %v391 = vpop.f32.mrb[0].mxu0
    %v392 = vadd.f32 %v307, %v391
    %v393 = vpop.f32.mrb[0].mxu0
    %v394 = vpop.f32.mrb[0].mxu0
    %v395 = vpop.f32.mrb[0].mxu0
    %396 = vdwg.mxu0
    %397 = vst [vmem:[#allocation12] sm:$0xff] %v392
    // Predicated region
    $region46: #{vanilla_nn_forward.1} parent=1 // pred_check
      _
    $region47: #{vanilla_nn_forward.1} parent=1 // pred_check_branch
      %399 = sbr.rel (0) target = $region49
    $region48: #{vanilla_nn_forward.1} parent=1 // pred_region
      %s401 = ssub.s32 128, 128
      %402 = vsyncadd [#allocation6], %s401
      %s404 = sshll.u32 [#allocation12], 4
      %s405 = int_to_ptr.vmem [resolvable:$true] %s404
      %407 = dma.vmem_to_hbm [thread:$0]  %s405, 128, %s8, [#allocation6]
    $region49: #{vanilla_nn_forward.1} parent=1 // pred_fallthru
      _
    // Predicated region
    $region50: #{vanilla_nn_forward.1} parent=1 // pred_check
      _
    $region51: #{vanilla_nn_forward.1} parent=1 // pred_check_branch
      %409 = sbr.rel (0) target = $region53
    $region52: #{vanilla_nn_forward.1} parent=1 // pred_region
      %410 = dma.done [#allocation6], 128
    $region53: #{vanilla_nn_forward.1} parent=1 // pred_fallthru
      _
    %411 = vsyncpa [#allocation5], 1
    %412 = vsyncpa [#allocation8], 1
    %413 = vsyncpa [#allocation11], 1
    %414 = vsyncpa [#allocation6], 1

</llo_original>
